<compile_context>
chip_gen: v5e
topology: v5e:2x2
jax: 0.10.0
libtpu: 0.0.40
codegen_flags: <defaults>
</compile_context>

<pallas_src>
import functools

import jax
import jax.numpy as jnp
from jax.experimental import pallas as pl
from jax.experimental.pallas import tpu as pltpu

_LANES = 128
_SUBLANES = 8


def _cdiv(a, b):
    return -(-a // b)


def _round_up(a, b):
    return _cdiv(a, b) * b


def _prep_stream(a):
    """View a stream as 2D with a copy-free reshape (no jnp.pad).

    Returns (arr2d, rows, cols).  Lane-dense [n/128, 128] when possible,
    otherwise the natural [prod(leading), last_dim] layout.
    """
    n = int(a.size)
    if n % _LANES == 0:
        arr = a.reshape(n // _LANES, _LANES)
    elif a.ndim >= 2:
        arr = a.reshape(-1, a.shape[-1])
    else:
        arr = a.reshape(1, n)
    return arr, int(arr.shape[0]), int(arr.shape[1])


def _tile_rows(rows, cols, budget_elems):
    """Per-stream row tile: multiple of 8, capped by a per-block VMEM budget."""
    lanes_padded = _round_up(cols, _LANES)
    max_tr = max(_SUBLANES, (budget_elems // lanes_padded) // _SUBLANES * _SUBLANES)
    return min(max_tr, _round_up(rows, _SUBLANES))


def _goggle_loss_kernel(half, total_steps, specs, use_prior, *refs):
    """specs: ((nb, tr, valid_last_rows) for the mse, kld and graph streams)."""
    n_in = 6 if use_prior else 5
    xr_ref, x_ref, mu_ref, lv_ref, g_ref = refs[:5]
    gp_ref = refs[5] if use_prior else None
    out_ref = refs[n_in]
    mse_acc, kld_acc, g_acc = refs[n_in + 1:]

    core = pl.program_id(0)       # "parallel" axis (megacore split on v7x)
    step = pl.program_id(1)       # "arbitrary" reduction axis
    gstep = core * half + step    # global row-block index

    @pl.when(step == 0)
    def _init():
        mse_acc[...] = jnp.zeros_like(mse_acc)
        kld_acc[...] = jnp.zeros_like(kld_acc)
        g_acc[...] = jnp.zeros_like(g_acc)

    def accum(acc_ref, v, mask):
        if mask is not None:
            v = jnp.where(mask, v, jnp.float32(0.0))
        # Sublane-axis reduction: bulk is plain VPU adds across vregs, RMW of a
        # single vreg row in the accumulator.  Lane reduction waits for finalize.
        acc_ref[...] += jnp.sum(v, axis=0, keepdims=True)

    def emit(spec, block_shape, body):
        nb, tr, valid_last = spec
        _, cols = block_shape
        ragged = valid_last != tr

        def full_body():
            body(None)

        def last_body():
            mask = jax.lax.broadcasted_iota(jnp.int32, (tr, cols), 0) < valid_last
            body(mask)

        if not ragged:
            if nb == total_steps:     # stream spans the whole grid: no branch
                full_body()
            else:                     # skip steps past this stream's last block
                pl.when(gstep < nb)(full_body)
        else:
            if nb > 1:
                pl.when(gstep < nb - 1)(full_body)
            pl.when(gstep == nb - 1)(last_body)   # masked ragged last block

    def mse_body(mask):
        d = xr_ref[...].astype(jnp.float32) - x_ref[...].astype(jnp.float32)
        accum(mse_acc, d * d, mask)

    def kld_body(mask):
        m = mu_ref[...].astype(jnp.float32)
        lv = lv_ref[...].astype(jnp.float32)
        # "+1" term hoisted to the wrapper (added once as numel(mu)); exp on EUP.
        accum(kld_acc, lv - m * m - jnp.exp(lv), mask)

    def graph_body(mask):
        g = g_ref[...].astype(jnp.float32)
        if use_prior:
            g = g - gp_ref[...].astype(jnp.float32)
        accum(g_acc, jnp.abs(g), mask)

    emit(specs[0], xr_ref.shape, mse_body)
    emit(specs[1], mu_ref.shape, kld_body)
    emit(specs[2], g_ref.shape, graph_body)

    @pl.when(step == half - 1)
    def _finalize():
        # Per-core raw partial sums; the wrapper combines cores and applies the
        # scalar constants (numel, alpha, beta).
        out_ref[0, 0] = jnp.sum(mse_acc[...])
        out_ref[0, 1] = jnp.sum(kld_acc[...])
        out_ref[0, 2] = jnp.sum(g_acc[...])


def goggle_loss(x_recon, x, mu, logvar, graph, *, alpha=1.0, beta=0.0,
                graph_prior=None, tile_rows=1024, num_cores=2):
    """Pallas TPU implementation of GoggleLoss.forward.

    Inputs may be float32 or bfloat16 (bf16 halves HBM traffic; accumulation is
    always f32).  Returns (loss, loss_mse, loss_kld, loss_graph) as f32 scalars.
    """
    x_recon = jnp.asarray(x_recon)
    x = jnp.asarray(x)
    mu = jnp.asarray(mu)
    logvar = jnp.asarray(logvar)
    graph = jnp.asarray(graph)
    use_prior = graph_prior is not None
    if use_prior:
        graph_prior = jnp.asarray(graph_prior)
        assert graph_prior.shape == graph.shape
    assert x_recon.shape == x.shape
    assert mu.shape == logvar.shape

    # Per-block element budget: tile_rows rows at 128 lanes of f32.
    budget_elems = max(int(tile_rows), _SUBLANES) * _LANES

    streams = [x_recon, x, mu, logvar, graph] + ([graph_prior] if use_prior else [])
    prepped = [_prep_stream(s) for s in streams]
    arrs = [p[0] for p in prepped]

    def stream_spec(idx):
        _, rows, cols = prepped[idx]
        tr = _tile_rows(rows, cols, budget_elems)
        nb = _cdiv(rows, tr)
        valid_last = rows - (nb - 1) * tr
        return tr, cols, nb, valid_last

    mse_tr, mse_cols, mse_nb, mse_valid = stream_spec(0)   # x_recon / x
    kld_tr, kld_cols, kld_nb, kld_valid = stream_spec(2)   # mu / logvar
    g_tr, g_cols, g_nb, g_valid = stream_spec(4)           # graph (/ prior)

    nb_max = max(mse_nb, kld_nb, g_nb)
    nc = max(1, min(int(num_cores), nb_max))   # don't spawn idle cores
    half = _cdiv(nb_max, nc)                   # row-blocks per core
    total_steps = nc * half

    def make_spec(tr, cols, nb):
        # Clamp to the last valid block: once the index stops changing the
        # pipeline issues no further DMAs for this stream.
        def idx(c, i, nb=nb, h=half):
            return (jnp.minimum(c * h + i, nb - 1), 0)
        return pl.BlockSpec((tr, cols), idx)

    in_specs = [
        make_spec(mse_tr, mse_cols, mse_nb),
        make_spec(mse_tr, mse_cols, mse_nb),
        make_spec(kld_tr, kld_cols, kld_nb),
        make_spec(kld_tr, kld_cols, kld_nb),
        make_spec(g_tr, g_cols, g_nb),
    ]
    if use_prior:
        in_specs.append(make_spec(g_tr, g_cols, g_nb))

    specs = ((mse_nb, mse_tr, mse_valid),
             (kld_nb, kld_tr, kld_valid),
             (g_nb, g_tr, g_valid))

    kernel = functools.partial(_goggle_loss_kernel, half, total_steps, specs,
                               use_prior)

    in_bytes = sum(int(a.size) * a.dtype.itemsize for a in arrs)
    flops = (3 * int(x.size) + 4 * int(mu.size)
             + (3 if use_prior else 2) * int(graph.size))
    cost = pl.CostEstimate(flops=flops, transcendentals=int(mu.size),
                           bytes_accessed=in_bytes + nc * 3 * 4)

    partials = pl.pallas_call(
        kernel,
        out_shape=jax.ShapeDtypeStruct((nc, 3), jnp.float32),
        grid=(nc, half),
        in_specs=in_specs,
        out_specs=pl.BlockSpec((1, 3), lambda c, i: (c, 0),
                               memory_space=pltpu.MemorySpace.SMEM),
        scratch_shapes=[pltpu.VMEM((1, mse_cols), jnp.float32),
                        pltpu.VMEM((1, kld_cols), jnp.float32),
                        pltpu.VMEM((1, g_cols), jnp.float32)],
        compiler_params=pltpu.CompilerParams(
            dimension_semantics=("parallel", "arbitrary"),
            vmem_limit_bytes=32 * 1024 * 1024),
        cost_estimate=cost,
    )(*arrs)

    loss_mse = jnp.sum(partials[:, 0])
    kld_sum = jnp.sum(partials[:, 1])
    graph_l1 = jnp.sum(partials[:, 2])
    loss_kld = jnp.float32(-0.5) * (jnp.float32(int(mu.size)) + kld_sum)
    loss_graph = graph_l1 * jnp.float32(1.0 / int(graph.size))
    loss = (loss_mse + jnp.float32(alpha) * loss_kld
            + jnp.float32(beta) * loss_graph)
    return loss, loss_mse, loss_kld, loss_graph


def _reference(x_recon, x, mu, logvar, graph, alpha, beta, graph_prior=None):
    x_recon = x_recon.astype(jnp.float32)
    x = x.astype(jnp.float32)
    mu = mu.astype(jnp.float32)
    logvar = logvar.astype(jnp.float32)
    graph = graph.astype(jnp.float32)
    loss_mse = jnp.sum((x_recon - x) ** 2)
    loss_kld = -0.5 * jnp.sum(1.0 + logvar - mu ** 2 - jnp.exp(logvar))
    if graph_prior is not None:
        loss_graph = jnp.sum(jnp.abs(graph - graph_prior.astype(jnp.float32))) / graph.size
    else:
        loss_graph = jnp.sum(jnp.abs(graph)) / graph.size
    loss = loss_mse + alpha * loss_kld + beta * loss_graph
    return loss, loss_mse, loss_kld, loss_graph


def _check(out, ref, tag):
    for o, r in zip(out, ref):
        assert jnp.allclose(o, r, rtol=2e-5, atol=1e-2), (tag, o, r)


if __name__ == "__main__":
    key = jax.random.PRNGKey(0)
    k1, k2, k3, k4, k5, k6 = jax.random.split(key, 6)

    # Small shapes consistent with the module's forward:
    #   x_recon / x : [batch, n_features], mu / logvar : [batch, latent],
    #   graph       : [n_features, n_features]
    B, D, L = 8, 16, 8
    x_recon = jax.random.normal(k1, (B, D), dtype=jnp.float32)
    x = jax.random.normal(k2, (B, D), dtype=jnp.float32)
    mu = jax.random.normal(k3, (B, L), dtype=jnp.float32)
    logvar = jax.random.normal(k4, (B, L), dtype=jnp.float32) * 0.1
    graph = jax.random.normal(k5, (D, D), dtype=jnp.float32)
    graph_prior = jax.random.normal(k6, (D, D), dtype=jnp.float32)

    alpha, beta = 1.0, 0.5

    # 1) Default configuration: no graph prior.
    out = goggle_loss(x_recon, x, mu, logvar, graph, alpha=alpha, beta=beta)
    out = jax.block_until_ready(out)
    _check(out, _reference(x_recon, x, mu, logvar, graph, alpha, beta), "noprior")

    # 2) With a graph prior (use_prior=True path).
    out_p = goggle_loss(x_recon, x, mu, logvar, graph,
                        alpha=alpha, beta=beta, graph_prior=graph_prior)
    out_p = jax.block_until_ready(out_p)
    _check(out_p, _reference(x_recon, x, mu, logvar, graph, alpha, beta,
                             graph_prior), "prior")

    # 3) Larger, non-divisible shapes with a small tile: exercises the natural
    #    (copy-free) 2D layouts, multi-block reduction, clamped index maps,
    #    pl.when guards, ragged last-block masking and the 2-way core split.
    kk = jax.random.split(jax.random.PRNGKey(1), 6)
    B2, D2, L2 = 300, 77, 33
    xr2 = jax.random.normal(kk[0], (B2, D2), dtype=jnp.float32)
    x2 = jax.random.normal(kk[1], (B2, D2), dtype=jnp.float32)
    mu2 = jax.random.normal(kk[2], (B2, L2), dtype=jnp.float32)
    lv2 = jax.random.normal(kk[3], (B2, L2), dtype=jnp.float32) * 0.1
    g2 = jax.random.normal(kk[4], (D2, D2), dtype=jnp.float32)
    gp2 = jax.random.normal(kk[5], (D2, D2), dtype=jnp.float32)

    out_g = goggle_loss(xr2, x2, mu2, lv2, g2, alpha=0.7, beta=1.3,
                        graph_prior=gp2, tile_rows=16)
    out_g = jax.block_until_ready(out_g)
    _check(out_g, _reference(xr2, x2, mu2, lv2, g2, 0.7, 1.3, gp2), "grid")

    # 4) bf16 inputs end-to-end (f32 accumulation in-kernel).
    kb = jax.random.split(jax.random.PRNGKey(2), 5)
    B3, D3, L3 = 64, 32, 24
    xr3 = jax.random.normal(kb[0], (B3, D3), dtype=jnp.bfloat16)
    x3 = jax.random.normal(kb[1], (B3, D3), dtype=jnp.bfloat16)
    mu3 = jax.random.normal(kb[2], (B3, L3), dtype=jnp.bfloat16)
    lv3 = (jax.random.normal(kb[3], (B3, L3), dtype=jnp.float32) * 0.1).astype(jnp.bfloat16)
    g3 = jax.random.normal(kb[4], (D3, D3), dtype=jnp.bfloat16)

    out_b = goggle_loss(xr3, x3, mu3, lv3, g3, alpha=1.2, beta=0.3)
    out_b = jax.block_until_ready(out_b)
    _check(out_b, _reference(xr3, x3, mu3, lv3, g3, 1.2, 0.3), "bf16")

    print("KERNEL_OK")
</pallas_src>

<mosaic_0001>
module attributes {stable_mosaic.version = 11 : i64} {
  func.func @_goggle_loss_kernel(%arg0: i32, %arg1: i32, %arg2: memref<8x128xf32, #tpu.memory_space<vmem>>, %arg3: memref<8x128xf32, #tpu.memory_space<vmem>>, %arg4: memref<8x8xf32, #tpu.memory_space<vmem>>, %arg5: memref<8x8xf32, #tpu.memory_space<vmem>>, %arg6: memref<8x128xf32, #tpu.memory_space<vmem>>, %arg7: memref<1x3xf32, #tpu.memory_space<smem>>, %arg8: memref<1x128xf32, #tpu.memory_space<vmem>>, %arg9: memref<1x8xf32, #tpu.memory_space<vmem>>, %arg10: memref<1x128xf32, #tpu.memory_space<vmem>>) attributes {dimension_semantics = [#tpu.dimension_semantics<parallel>, #tpu.dimension_semantics<arbitrary>], iteration_bounds = array<i64: 1, 1>, scalar_prefetch = 0 : i64, scratch_operands = 3 : i64, tpu.core_type = #tpu.core_type<tc>, window_params = [{transform_indices = @transform_0, window_bounds = array<i64: 8, 128>}, {transform_indices = @transform_1, window_bounds = array<i64: 8, 128>}, {transform_indices = @transform_2, window_bounds = array<i64: 8, 8>}, {transform_indices = @transform_3, window_bounds = array<i64: 8, 8>}, {transform_indices = @transform_4, window_bounds = array<i64: 8, 128>}, {transform_indices = @transform_5, window_bounds = array<i64: 1, 3>}]} {
    %c1_i32 = arith.constant 1 : i32
    %0 = arith.muli %arg0, %c1_i32 : i32
    %1 = arith.addi %0, %arg1 : i32
    %c0_i32 = arith.constant 0 : i32
    %2 = arith.cmpi eq, %arg1, %c0_i32 : i32
    %3 = arith.extui %2 : i1 to i32
    %c0_i32_0 = arith.constant 0 : i32
    %4 = arith.cmpi ne, %3, %c0_i32_0 : i32
    scf.if %4 {
      %cst_14 = arith.constant 0.000000e+00 : f32
      %25 = vector.broadcast %cst_14 : f32 to vector<1x128xf32>
      %c0_15 = arith.constant 0 : index
      %c0_16 = arith.constant 0 : index
      %26 = vector.load %arg8[%c0_15, %c0_16] : memref<1x128xf32, #tpu.memory_space<vmem>>, vector<1x128xf32>
      tpu.vector_store %arg8[%c0_15, %c0_16], %25 {strides = array<i32>} : memref<1x128xf32, #tpu.memory_space<vmem>>, vector<1x128xf32>,
      %cst_17 = arith.constant 0.000000e+00 : f32
      %27 = vector.broadcast %cst_17 : f32 to vector<1x8xf32>
      %c0_18 = arith.constant 0 : index
      %c0_19 = arith.constant 0 : index
      %28 = vector.load %arg9[%c0_18, %c0_19] : memref<1x8xf32, #tpu.memory_space<vmem>>, vector<1x8xf32>
      tpu.vector_store %arg9[%c0_18, %c0_19], %27 {strides = array<i32>} : memref<1x8xf32, #tpu.memory_space<vmem>>, vector<1x8xf32>,
      %cst_20 = arith.constant 0.000000e+00 : f32
      %29 = vector.broadcast %cst_20 : f32 to vector<1x128xf32>
      %c0_21 = arith.constant 0 : index
      %c0_22 = arith.constant 0 : index
      %30 = vector.load %arg10[%c0_21, %c0_22] : memref<1x128xf32, #tpu.memory_space<vmem>>, vector<1x128xf32>
      tpu.vector_store %arg10[%c0_21, %c0_22], %29 {strides = array<i32>} : memref<1x128xf32, #tpu.memory_space<vmem>>, vector<1x128xf32>,
    } else {
    }
    %c0_i32_1 = arith.constant 0 : i32
    %5 = arith.cmpi eq, %1, %c0_i32_1 : i32
    %6 = arith.extui %5 : i1 to i32
    %c0_i32_2 = arith.constant 0 : i32
    %7 = arith.cmpi ne, %6, %c0_i32_2 : i32
    scf.if %7 {
      %25 = tpu.iota {dimensions = array<i32: 0>} : vector<8x128xi32>
      %c1_i32_14 = arith.constant 1 : i32
      %26 = vector.broadcast %c1_i32_14 : i32 to vector<8x128xi32>
      %27 = arith.cmpi slt, %25, %26 : vector<8x128xi32>
      %c0_15 = arith.constant 0 : index
      %c0_16 = arith.constant 0 : index
      %28 = vector.load %arg2[%c0_15, %c0_16] : memref<8x128xf32, #tpu.memory_space<vmem>>, vector<8x128xf32>
      %c0_17 = arith.constant 0 : index
      %c0_18 = arith.constant 0 : index
      %29 = vector.load %arg3[%c0_17, %c0_18] : memref<8x128xf32, #tpu.memory_space<vmem>>, vector<8x128xf32>
      %30 = arith.subf %28, %29 : vector<8x128xf32>
      %31 = arith.mulf %30, %30 : vector<8x128xf32>
      %cst_19 = arith.constant 0.000000e+00 : f32
      %32 = vector.broadcast %cst_19 : f32 to vector<8x128xf32>
      %33 = arith.select %27, %31, %32 : vector<8x128xi1>, vector<8x128xf32>
      %c0_20 = arith.constant 0 : index
      %c0_21 = arith.constant 0 : index
      %34 = vector.load %arg8[%c0_20, %c0_21] : memref<1x128xf32, #tpu.memory_space<vmem>>, vector<1x128xf32>
      %cst_22 = arith.constant dense<0.000000e+00> : vector<128xf32>
      %35 = vector.multi_reduction <add>, %33, %cst_22 [0] : vector<8x128xf32> to vector<128xf32>
      %36 = vector.shape_cast %35 : vector<128xf32> to vector<1x128xf32>
      %37 = arith.addf %34, %36 : vector<1x128xf32>
      %c0_23 = arith.constant 0 : index
      %c0_24 = arith.constant 0 : index
      %38 = vector.load %arg8[%c0_23, %c0_24] : memref<1x128xf32, #tpu.memory_space<vmem>>, vector<1x128xf32>
      tpu.vector_store %arg8[%c0_23, %c0_24], %37 {strides = array<i32>} : memref<1x128xf32, #tpu.memory_space<vmem>>, vector<1x128xf32>,
    } else {
    }
    %c0 = arith.constant 0 : index
    %c0_3 = arith.constant 0 : index
    %8 = vector.load %arg4[%c0, %c0_3] : memref<8x8xf32, #tpu.memory_space<vmem>>, vector<8x8xf32>
    %c0_4 = arith.constant 0 : index
    %c0_5 = arith.constant 0 : index
    %9 = vector.load %arg5[%c0_4, %c0_5] : memref<8x8xf32, #tpu.memory_space<vmem>>, vector<8x8xf32>
    %10 = arith.mulf %8, %8 : vector<8x8xf32>
    %11 = arith.subf %9, %10 : vector<8x8xf32>
    %12 = math.exp %9 : vector<8x8xf32>
    %13 = arith.subf %11, %12 : vector<8x8xf32>
    %c0_6 = arith.constant 0 : index
    %c0_7 = arith.constant 0 : index
    %14 = vector.load %arg9[%c0_6, %c0_7] : memref<1x8xf32, #tpu.memory_space<vmem>>, vector<1x8xf32>
    %cst = arith.constant dense<0.000000e+00> : vector<8xf32>
    %15 = vector.multi_reduction <add>, %13, %cst [0] : vector<8x8xf32> to vector<8xf32>
    %16 = vector.shape_cast %15 : vector<8xf32> to vector<1x8xf32>
    %17 = arith.addf %14, %16 : vector<1x8xf32>
    %c0_8 = arith.constant 0 : index
    %c0_9 = arith.constant 0 : index
    %18 = vector.load %arg9[%c0_8, %c0_9] : memref<1x8xf32, #tpu.memory_space<vmem>>, vector<1x8xf32>
    tpu.vector_store %arg9[%c0_8, %c0_9], %17 {strides = array<i32>} : memref<1x8xf32, #tpu.memory_space<vmem>>, vector<1x8xf32>,
    %c0_i32_10 = arith.constant 0 : i32
    %19 = arith.cmpi eq, %1, %c0_i32_10 : i32
    %20 = arith.extui %19 : i1 to i32
    %c0_i32_11 = arith.constant 0 : i32
    %21 = arith.cmpi ne, %20, %c0_i32_11 : i32
    scf.if %21 {
      %25 = tpu.iota {dimensions = array<i32: 0>} : vector<8x128xi32>
      %c2_i32 = arith.constant 2 : i32
      %26 = vector.broadcast %c2_i32 : i32 to vector<8x128xi32>
      %27 = arith.cmpi slt, %25, %26 : vector<8x128xi32>
      %c0_14 = arith.constant 0 : index
      %c0_15 = arith.constant 0 : index
      %28 = vector.load %arg6[%c0_14, %c0_15] : memref<8x128xf32, #tpu.memory_space<vmem>>, vector<8x128xf32>
      %29 = math.absf %28 : vector<8x128xf32>
      %cst_16 = arith.constant 0.000000e+00 : f32
      %30 = vector.broadcast %cst_16 : f32 to vector<8x128xf32>
      %31 = arith.select %27, %29, %30 : vector<8x128xi1>, vector<8x128xf32>
      %c0_17 = arith.constant 0 : index
      %c0_18 = arith.constant 0 : index
      %32 = vector.load %arg10[%c0_17, %c0_18] : memref<1x128xf32, #tpu.memory_space<vmem>>, vector<1x128xf32>
      %cst_19 = arith.constant dense<0.000000e+00> : vector<128xf32>
      %33 = vector.multi_reduction <add>, %31, %cst_19 [0] : vector<8x128xf32> to vector<128xf32>
      %34 = vector.shape_cast %33 : vector<128xf32> to vector<1x128xf32>
      %35 = arith.addf %32, %34 : vector<1x128xf32>
      %c0_20 = arith.constant 0 : index
      %c0_21 = arith.constant 0 : index
      %36 = vector.load %arg10[%c0_20, %c0_21] : memref<1x128xf32, #tpu.memory_space<vmem>>, vector<1x128xf32>
      tpu.vector_store %arg10[%c0_20, %c0_21], %35 {strides = array<i32>} : memref<1x128xf32, #tpu.memory_space<vmem>>, vector<1x128xf32>,
    } else {
    }
    %c0_i32_12 = arith.constant 0 : i32
    %22 = arith.cmpi eq, %arg1, %c0_i32_12 : i32
    %23 = arith.extui %22 : i1 to i32
    %c0_i32_13 = arith.constant 0 : i32
    %24 = arith.cmpi ne, %23, %c0_i32_13 : i32
    scf.if %24 {
      %c0_14 = arith.constant 0 : index
      %c0_15 = arith.constant 0 : index
      %25 = vector.load %arg8[%c0_14, %c0_15] : memref<1x128xf32, #tpu.memory_space<vmem>>, vector<1x128xf32>
      %26 = vector.shape_cast %25 : vector<1x128xf32> to vector<1x1x128xf32>
      %cst_16 = arith.constant dense<0.000000e+00> : vector<1xf32>
      %27 = vector.multi_reduction <add>, %26, %cst_16 [1, 2] : vector<1x1x128xf32> to vector<1xf32>
      %28 = vector.shape_cast %27 : vector<1xf32> to vector<1x1x1xf32>
      %29 = vector.extract %28[0, 0, 0] : f32 from vector<1x1x1xf32>
      %c0_17 = arith.constant 0 : index
      %c0_18 = arith.constant 0 : index
      %30 = memref.load %arg7[%c0_17, %c0_18] : memref<1x3xf32, #tpu.memory_space<smem>>
      memref.store %29, %arg7[%c0_17, %c0_18] : memref<1x3xf32, #tpu.memory_space<smem>>
      %c0_19 = arith.constant 0 : index
      %c0_20 = arith.constant 0 : index
      %31 = vector.load %arg9[%c0_19, %c0_20] : memref<1x8xf32, #tpu.memory_space<vmem>>, vector<1x8xf32>
      %32 = vector.shape_cast %31 : vector<1x8xf32> to vector<1x1x8xf32>
      %cst_21 = arith.constant dense<0.000000e+00> : vector<1xf32>
      %33 = vector.multi_reduction <add>, %32, %cst_21 [1, 2] : vector<1x1x8xf32> to vector<1xf32>
      %34 = vector.shape_cast %33 : vector<1xf32> to vector<1x1x1xf32>
      %35 = vector.extract %34[0, 0, 0] : f32 from vector<1x1x1xf32>
      %c0_22 = arith.constant 0 : index
      %c1 = arith.constant 1 : index
      %36 = memref.load %arg7[%c0_22, %c1] : memref<1x3xf32, #tpu.memory_space<smem>>
      memref.store %35, %arg7[%c0_22, %c1] : memref<1x3xf32, #tpu.memory_space<smem>>
      %c0_23 = arith.constant 0 : index
      %c0_24 = arith.constant 0 : index
      %37 = vector.load %arg10[%c0_23, %c0_24] : memref<1x128xf32, #tpu.memory_space<vmem>>, vector<1x128xf32>
      %38 = vector.shape_cast %37 : vector<1x128xf32> to vector<1x1x128xf32>
      %cst_25 = arith.constant dense<0.000000e+00> : vector<1xf32>
      %39 = vector.multi_reduction <add>, %38, %cst_25 [1, 2] : vector<1x1x128xf32> to vector<1xf32>
      %40 = vector.shape_cast %39 : vector<1xf32> to vector<1x1x1xf32>
      %41 = vector.extract %40[0, 0, 0] : f32 from vector<1x1x1xf32>
      %c0_26 = arith.constant 0 : index
      %c2 = arith.constant 2 : index
      %42 = memref.load %arg7[%c0_26, %c2] : memref<1x3xf32, #tpu.memory_space<smem>>
      memref.store %41, %arg7[%c0_26, %c2] : memref<1x3xf32, #tpu.memory_space<smem>>
    } else {
    }
    return
  }
  func.func @transform_0(%arg0: i32, %arg1: i32) -> (i32, i32) {
    %c1_i32 = arith.constant 1 : i32
    %0 = arith.muli %arg0, %c1_i32 : i32
    %1 = arith.addi %0, %arg1 : i32
    %c0_i32 = arith.constant 0 : i32
    %2 = arith.minsi %1, %c0_i32 : i32
    %c0_i32_0 = arith.constant 0 : i32
    %c0_i32_1 = arith.constant 0 : i32
    return %2, %c0_i32_0 : i32, i32
  }
  func.func @transform_1(%arg0: i32, %arg1: i32) -> (i32, i32) {
    %c1_i32 = arith.constant 1 : i32
    %0 = arith.muli %arg0, %c1_i32 : i32
    %1 = arith.addi %0, %arg1 : i32
    %c0_i32 = arith.constant 0 : i32
    %2 = arith.minsi %1, %c0_i32 : i32
    %c0_i32_0 = arith.constant 0 : i32
    %c0_i32_1 = arith.constant 0 : i32
    return %2, %c0_i32_0 : i32, i32
  }
  func.func @transform_2(%arg0: i32, %arg1: i32) -> (i32, i32) {
    %c1_i32 = arith.constant 1 : i32
    %0 = arith.muli %arg0, %c1_i32 : i32
    %1 = arith.addi %0, %arg1 : i32
    %c0_i32 = arith.constant 0 : i32
    %2 = arith.minsi %1, %c0_i32 : i32
    %c0_i32_0 = arith.constant 0 : i32
    %c0_i32_1 = arith.constant 0 : i32
    return %2, %c0_i32_0 : i32, i32
  }
  func.func @transform_3(%arg0: i32, %arg1: i32) -> (i32, i32) {
    %c1_i32 = arith.constant 1 : i32
    %0 = arith.muli %arg0, %c1_i32 : i32
    %1 = arith.addi %0, %arg1 : i32
    %c0_i32 = arith.constant 0 : i32
    %2 = arith.minsi %1, %c0_i32 : i32
    %c0_i32_0 = arith.constant 0 : i32
    %c0_i32_1 = arith.constant 0 : i32
    return %2, %c0_i32_0 : i32, i32
  }
  func.func @transform_4(%arg0: i32, %arg1: i32) -> (i32, i32) {
    %c1_i32 = arith.constant 1 : i32
    %0 = arith.muli %arg0, %c1_i32 : i32
    %1 = arith.addi %0, %arg1 : i32
    %c0_i32 = arith.constant 0 : i32
    %2 = arith.minsi %1, %c0_i32 : i32
    %c0_i32_0 = arith.constant 0 : i32
    %c0_i32_1 = arith.constant 0 : i32
    return %2, %c0_i32_0 : i32, i32
  }
  func.func @transform_5(%arg0: i32, %arg1: i32) -> (i32, i32) {
    %c0_i32 = arith.constant 0 : i32
    %c0_i32_0 = arith.constant 0 : i32
    return %arg0, %c0_i32 : i32, i32
  }
}

</mosaic_0001>

<llo_original>
// kernel: tpu_custom_call.1
$region0: #{tpu_custom_call.1}
  #allocation0 [shape = 'u32[]', space=smem, size = 0x4, offset = 0x4, fixed_abs, tag = 'smem constant byte address 0x4 - core index']
  #allocation1 [shape = 'u32[72,128]{1,0:T(1,128)}', space=vmem, size = 0x9000, scoped, tag = 'internal scratch']
  #allocation2 [shape = 'f32[1,128]{1,0:T(1,128)}', space=vmem, size = 0x200, scoped, tag = 'scratch operand']
  #allocation3 [shape = 'f32[1,8]{1,0:T(1,128)}', space=vmem, size = 0x200, scoped, tag = 'scratch operand']
  #allocation4 [shape = 'f32[1,128]{1,0:T(1,128)}', space=vmem, size = 0x200, scoped, tag = 'scratch operand']
  %s0 = inlined_call_operand.hbm [shape: f32[1,128], index: 0, kind: input, shape index: {}]
  %s1 = inlined_call_operand.hbm [shape: f32[1,128], index: 1, kind: input, shape index: {}]
  %s2 = inlined_call_operand.hbm [shape: f32[8,8], index: 2, kind: input, shape index: {}]
  %s3 = inlined_call_operand.hbm [shape: f32[8,8], index: 3, kind: input, shape index: {}]
  %s4 = inlined_call_operand.vmem [shape: f32[2,128], index: 4, kind: input, shape index: {}]
  %s5 = inlined_call_operand.hbm [shape: f32[1,3], index: 5, kind: output, shape index: {}]
  %s6 = sld [smem:[#allocation0]]
  $region62: #{tpu_custom_call.1} parent=0
    _
  %s8 = ssub.s32 1, %s6
  %s9 = scalar_select 0, %s8, %s6
  $region1: #{tpu_custom_call.1} parent=0
    #allocation5 [shape = 'u8[4096]{0}', space=vmem, size = 0x1000, scoped, tag = 'input window, operand 0, single buffered']
    #allocation6 [shape = 's32[1]{0}', space=sflag, size = 0x4, scoped, tag = 'scoped memory for tpu_custom_call.1']
    #allocation7 [shape = 's32[1]{0}', space=sflag, size = 0x4, scoped, tag = 'scoped memory for tpu_custom_call.1']
    #allocation8 [shape = 'u8[4096]{0}', space=vmem, size = 0x1000, scoped, tag = 'input window, operand 1, single buffered']
    #allocation9 [shape = 's32[1]{0}', space=sflag, size = 0x4, scoped, tag = 'scoped memory for tpu_custom_call.1']
    #allocation10 [shape = 'u8[4096]{0}', space=vmem, size = 0x1000, scoped, tag = 'input window, operand 2, single buffered']
    #allocation11 [shape = 'u8[4096]{0}', space=vmem, size = 0x1000, scoped, tag = 'input window, operand 3, single buffered']
    #allocation12 [shape = 's32[1]{0}', space=sflag, size = 0x4, scoped, tag = 'scoped memory for tpu_custom_call.1']
    #allocation13 [shape = 'u8[512]{0}', space=smem, size = 0x200, scoped, tag = 'output window, operand 0, single buffered']
    %10 = vsyncpa [#allocation6], 0
    %11 = vsyncpa [#allocation9], 0
    %12 = vsyncpa [#allocation12], 0
    %13 = vsyncpa [#allocation7], 0
    // Predicated region
    $region2: #{tpu_custom_call.1} parent=1 // pred_check
      _
    $region3: #{tpu_custom_call.1} parent=1 // pred_check_branch
      %15 = sbr.rel (0) target = $region5
    $region4: #{tpu_custom_call.1} parent=1 // pred_region
      %s16 = sadd.s32 0, 0
      %p17 = scmp.lt.s32.totalorder %s16, 0
      %s18 = scalar_select %p17, %s16, 0
      %s19 = smul.u32 8, %s18
      %s20 = ssub.s32 1, %s19
      %s21 = ssub.s32 8, %s20
      %s22 = sshll.u32 %s21, 4
      %23 = vsyncadd [#allocation6], %s22
      %p24 = scmp.ne.s32.totalorder 0, %s20
      %s25 = scalar_lea.hbm %s0, %s19
      %s26 = sshll.u32 %s25, 4
      %s27 = int_to_ptr.hbm [resolvable:$true] %s26
      %s28 = sshll.u32 [#allocation5], 4
      %s29 = int_to_ptr.vmem [resolvable:$true] %s28
      %s30 = sshll.u32 %s20, 4
      %34 = dma.hbm_to_vmem [thread:$0]  (%p24), %s27, %s30, %s29, [#allocation6], 16, 16, 1
    $region5: #{tpu_custom_call.1} parent=1 // pred_fallthru
      _
    // Predicated region
    $region6: #{tpu_custom_call.1} parent=1 // pred_check
      _
    $region7: #{tpu_custom_call.1} parent=1 // pred_check_branch
      %36 = sbr.rel (0) target = $region9
    $region8: #{tpu_custom_call.1} parent=1 // pred_region
      %s37 = sadd.s32 0, 0
      %p38 = scmp.lt.s32.totalorder %s37, 0
      %s39 = scalar_select %p38, %s37, 0
      %s40 = smul.u32 8, %s39
      %s41 = ssub.s32 1, %s40
      %s42 = ssub.s32 8, %s41
      %s43 = sshll.u32 %s42, 4
      %44 = vsyncadd [#allocation9], %s43
      %p45 = scmp.ne.s32.totalorder 0, %s41
      %s46 = scalar_lea.hbm %s1, %s40
      %s47 = sshll.u32 %s46, 4
      %s48 = int_to_ptr.hbm [resolvable:$true] %s47
      %s49 = sshll.u32 [#allocation8], 4
      %s50 = int_to_ptr.vmem [resolvable:$true] %s49
      %s51 = sshll.u32 %s41, 4
      %55 = dma.hbm_to_vmem [thread:$0]  (%p45), %s48, %s51, %s50, [#allocation9], 16, 16, 1
    $region9: #{tpu_custom_call.1} parent=1 // pred_fallthru
      _
    // Predicated region
    $region10: #{tpu_custom_call.1} parent=1 // pred_check
      _
    $region11: #{tpu_custom_call.1} parent=1 // pred_check_branch
      %57 = sbr.rel (0) target = $region13
    $region12: #{tpu_custom_call.1} parent=1 // pred_region
      %s58 = sadd.s32 0, 0
      %p59 = scmp.lt.s32.totalorder %s58, 0
      %s60 = scalar_select %p59, %s58, 0
      %62 = vsyncadd [#allocation9], 0
      %s63 = smul.addr %s60, 8
      %s64 = scalar_lea.hbm %s2, %s63
      %s66 = sshll.u32 %s64, 4
      %s67 = int_to_ptr.hbm [resolvable:$true] %s66
      %s68 = sshll.u32 [#allocation10], 4
      %s69 = int_to_ptr.vmem [resolvable:$true] %s68
      %71 = dma.hbm_to_vmem [thread:$0]  %s67, 128, %s69, [#allocation9]
    $region13: #{tpu_custom_call.1} parent=1 // pred_fallthru
      _
    // Predicated region
    $region14: #{tpu_custom_call.1} parent=1 // pred_check
      _
    $region15: #{tpu_custom_call.1} parent=1 // pred_check_branch
      %73 = sbr.rel (0) target = $region17
    $region16: #{tpu_custom_call.1} parent=1 // pred_region
      %s74 = sadd.s32 0, 0
      %p75 = scmp.lt.s32.totalorder %s74, 0
      %s76 = scalar_select %p75, %s74, 0
      %78 = vsyncadd [#allocation12], 0
      %s79 = smul.addr %s76, 8
      %s80 = scalar_lea.hbm %s3, %s79
      %s82 = sshll.u32 %s80, 4
      %s83 = int_to_ptr.hbm [resolvable:$true] %s82
      %s84 = sshll.u32 [#allocation11], 4
      %s85 = int_to_ptr.vmem [resolvable:$true] %s84
      %87 = dma.hbm_to_vmem [thread:$0]  %s83, 128, %s85, [#allocation12]
    $region17: #{tpu_custom_call.1} parent=1 // pred_fallthru
      _
    // Predicated region
    $region18: #{tpu_custom_call.1} parent=1 // pred_check
      _
    $region19: #{tpu_custom_call.1} parent=1 // pred_check_branch
      %89 = sbr.rel (0) target = $region21
    $region20: #{tpu_custom_call.1} parent=1 // pred_region
      %s90 = sadd.s32 0, 0
      %p91 = scmp.lt.s32.totalorder %s90, 0
      %s92 = scalar_select %p91, %s90, 0
      %s93 = smul.u32 4, %s92
      %s94 = ssub.s32 1, %s93
      %s95 = smul.u32 2, %s94
      %p96 = scmp.lt.s32.totalorder %s93, 0
      %s97 = scalar_select %p96, %s93, 0
      %s98 = smul.addr %s97, 2
      %s99 = scalar_lea.vmem %s4, %s98
      %s100 = sadd.s32 0, 0
      %p101 = scmp.lt.s32.totalorder %s100, 0
      %s102 = scalar_select %p101, %s100, 0
      %s103 = smul.u32 4, %s102
      %s104 = ssub.s32 1, %s103
      %s105 = smul.u32 2, %s104
    $region21: #{tpu_custom_call.1} parent=1 // pred_fallthru
      _
    // Predicated region
    $region22: #{tpu_custom_call.1} parent=1 // pred_check
      _
    $region23: #{tpu_custom_call.1} parent=1 // pred_check_branch
      %107 = sbr.rel (0) target = $region25
    $region24: #{tpu_custom_call.1} parent=1 // pred_region
      %109 = dma.done [#allocation6], 128
    $region25: #{tpu_custom_call.1} parent=1 // pred_fallthru
      _
    // Predicated region
    $region26: #{tpu_custom_call.1} parent=1 // pred_check
      _
    $region27: #{tpu_custom_call.1} parent=1 // pred_check_branch
      %111 = sbr.rel (0) target = $region29
    $region28: #{tpu_custom_call.1} parent=1 // pred_region
      %113 = dma.done [#allocation9], 128
    $region29: #{tpu_custom_call.1} parent=1 // pred_fallthru
      _
    // Predicated region
    $region30: #{tpu_custom_call.1} parent=1 // pred_check
      _
    $region31: #{tpu_custom_call.1} parent=1 // pred_check_branch
      %115 = sbr.rel (0) target = $region33
    $region32: #{tpu_custom_call.1} parent=1 // pred_region
      %117 = dma.done [#allocation9], 128
    $region33: #{tpu_custom_call.1} parent=1 // pred_fallthru
      _
    // Predicated region
    $region34: #{tpu_custom_call.1} parent=1 // pred_check
      _
    $region35: #{tpu_custom_call.1} parent=1 // pred_check_branch
      %119 = sbr.rel (0) target = $region37
    $region36: #{tpu_custom_call.1} parent=1 // pred_region
      %121 = dma.done [#allocation12], 128
    $region37: #{tpu_custom_call.1} parent=1 // pred_fallthru
      _
    %s122 = sadd.s32 0, 0
    %p123 = scmp.lt.s32.totalorder %s122, 0
    %s124 = scalar_select %p123, %s122, 0
    %s125 = smul.u32 4, %s124
    %s126 = ssub.s32 1, %s125
    %s127 = smul.u32 2, %s126
    %p128 = scmp.lt.s32.totalorder %s125, 0
    %s129 = scalar_select %p128, %s125, 0
    %s130 = smul.addr %s129, 2
    %s131 = scalar_lea.vmem %s4, %s130
    %s132 = sadd.s32 0, 0
    %p133 = scmp.lt.s32.totalorder %s132, 0
    %s134 = scalar_select %p133, %s132, 0
    %s135 = smul.u32 8, %s134
    %s136 = ssub.s32 1, %s135
    %s137 = sadd.s32 0, 0
    %p138 = scmp.lt.s32.totalorder %s137, 0
    %s139 = scalar_select %p138, %s137, 0
    %s140 = smul.u32 8, %s139
    %s141 = ssub.s32 1, %s140
    %s142 = sadd.s32 0, 0
    %p143 = scmp.lt.s32.totalorder %s142, 0
    %s144 = scalar_select %p143, %s142, 0
    %s145 = sadd.s32 0, 0
    %p146 = scmp.lt.s32.totalorder %s145, 0
    %s147 = scalar_select %p146, %s145, 0
    %s148 = sadd.s32 0, 0
    %p149 = scmp.lt.s32.totalorder %s148, 0
    %s150 = scalar_select %p149, %s148, 0
    %s151 = smul.u32 4, %s150
    %s152 = ssub.s32 1, %s151
    %s153 = smul.u32 2, %s152
    %p154 = scmp.lt.s32.totalorder %s151, 0
    %s155 = scalar_select %p154, %s151, 0
    %s156 = smul.addr %s155, 2
    %s157 = scalar_lea.vmem %s4, %s156
    %s158 = sadd.s32 0, 0
    %p159 = scmp.lt.s32.totalorder %s158, 0
    %s160 = scalar_select %p159, %s158, 0
    %s161 = smul.u32 4, %s160
    %s162 = ssub.s32 1, %s161
    %s163 = smul.u32 2, %s162
    %s164 = sadd.s32 0, 0
    %p165 = scmp.eq.s32.totalorder 0, 0
    // Predicated region
    $region38: #{tpu_custom_call.1} parent=1 // pred_check
      %p166 = pneg %p165
    $region39: #{tpu_custom_call.1} parent=1 // pred_check_branch
      %168 = sbr.rel (%p166) target = $region41
    $region40: #{tpu_custom_call.1} parent=1 // pred_region
      %169 = vst [vmem:[#allocation2] sm:$0x1] 0.0
      %vm170 = vcmask 57344
      %171 = vst.msk [vmem:[#allocation3] sm:$0x1] %vm170, 0.0
      %172 = vst [vmem:[#allocation4] sm:$0x1] 0.0
    $region41: #{tpu_custom_call.1} parent=1 // pred_fallthru
      _
    %p173 = scmp.eq.s32.totalorder %s164, 0
    // Predicated region
    $region42: #{tpu_custom_call.1} parent=1 // pred_check
      %p174 = pneg %p173
    $region43: #{tpu_custom_call.1} parent=1 // pred_check_branch
      %176 = sbr.rel (%p174) target = $region45
    $region44: #{tpu_custom_call.1} parent=1 // pred_region
      %v177 = vlaneseq
      %v178 = vshrl.u32 %v177, 7
      %vm179 = vcmp.lt.s32.totalorder %v178, 1
      %v180 = vld [vmem:[#allocation5] sm:$0xff]
      %v181 = vld [vmem:[#allocation8] sm:$0xff]
      %v182 = vsub.f32 %v180, %v181
      %v183 = vmul.f32 %v182, %v182
      %v184 = vsel %vm179, %v183, 0.0
      %v185 = vld [vmem:[#allocation2] sm:$0x1]
      %v186 = vrot.slane %v184, 4
      %v187 = vadd.f32 %v184, %v186
      %v188 = vrot.slane %v187, 2
      %v189 = vadd.f32 %v187, %v188
      %v190 = vrot.slane %v189, 1
      %v191 = vadd.f32 %v189, %v190
      %v192 = vadd.f32 %v185, %v191
      %193 = vst [vmem:[#allocation2] sm:$0x1] %v192
    $region45: #{tpu_custom_call.1} parent=1 // pred_fallthru
      _
    %v194 = vld [vmem:[#allocation10] sm:$0xff]
    %v195 = vld [vmem:[#allocation11] sm:$0xff]
    %v196 = vmul.f32 %v194, %v194
    %v197 = vsub.f32 %v195, %v196
    %v198 = vmul.f32 %v195, 1.442695
    %v199 = vpow.pop %v198
    %v200 = vsub.f32 %v197, %v199
    %v201 = vld [vmem:[#allocation3] sm:$0x1]
    %vm202 = vcmask 64512
    %v203 = vsel %vm202, %v200, 0.0
    %v204 = vrot.slane %v203, 4
    %v205 = vadd.f32 %v203, %v204
    %v206 = vrot.slane %v205, 2
    %v207 = vadd.f32 %v205, %v206
    %v208 = vrot.slane %v207, 1
    %v209 = vadd.f32 %v207, %v208
    %v210 = vadd.f32 %v201, %v209
    %vm211 = vcmask 57344
    %212 = vst.msk [vmem:[#allocation3] sm:$0x1] %vm211, %v210
    // Predicated region
    $region46: #{tpu_custom_call.1} parent=1 // pred_check
      %p213 = pneg %p173
    $region47: #{tpu_custom_call.1} parent=1 // pred_check_branch
      %215 = sbr.rel (%p213) target = $region49
    $region48: #{tpu_custom_call.1} parent=1 // pred_region
      %v216 = vlaneseq
      %v217 = vshrl.u32 %v216, 7
      %vm218 = vcmp.lt.s32.totalorder %v217, 2
      %v219 = vld [vmem:[%s157] sm:$0xff]
      %v220 = vand.u32 2147483647, %v219
      %v221 = vsel %vm218, %v220, 0.0
      %v222 = vld [vmem:[#allocation4] sm:$0x1]
      %v223 = vrot.slane %v221, 4
      %v224 = vadd.f32 %v221, %v223
      %v225 = vrot.slane %v224, 2
      %v226 = vadd.f32 %v224, %v225
      %v227 = vrot.slane %v226, 1
      %v228 = vadd.f32 %v226, %v227
      %v229 = vadd.f32 %v222, %v228
      %230 = vst [vmem:[#allocation4] sm:$0x1] %v229
    $region49: #{tpu_custom_call.1} parent=1 // pred_fallthru
      _
    // Predicated region
    $region50: #{tpu_custom_call.1} parent=1 // pred_check
      %p231 = pneg %p165
    $region51: #{tpu_custom_call.1} parent=1 // pred_check_branch
      %233 = sbr.rel (%p231) target = $region53
    $region52: #{tpu_custom_call.1} parent=1 // pred_region
      %v234 = vld [vmem:[#allocation2] sm:$0x1]
      %vm235 = vcmask 1040384
      %v236 = vsel %vm235, %v234, 0.0
      %237 = vadd.xlane.f32.xlu0 %v236
      %v238 = vpop.xlane.xlu0 %237
      %v239 = vrot.slane %v238, 4
      %v240 = vadd.f32 %v238, %v239
      %v241 = vrot.slane %v240, 2
      %v242 = vadd.f32 %v240, %v241
      %v243 = vrot.slane %v242, 1
      %v244 = vadd.f32 %v242, %v243
      %s245 = vtos %v244
      %s246 = scalar_lea.smem [#allocation13], 0
      %247 = sst [smem:[%s246]] %s245
      %v248 = vld [vmem:[#allocation3] sm:$0x1]
      %v249 = vsel %vm211, %v248, 0.0
      %250 = vadd.xlane.f32.xlu0 %v249
      %v251 = vpop.xlane.xlu0 %250
      %v252 = vrot.slane %v251, 4
      %v253 = vadd.f32 %v251, %v252
      %v254 = vrot.slane %v253, 2
      %v255 = vadd.f32 %v253, %v254
      %v256 = vrot.slane %v255, 1
      %v257 = vadd.f32 %v255, %v256
      %s258 = vtos %v257
      %s259 = scalar_lea.smem [#allocation13], 1
      %260 = sst [smem:[%s259]] %s258
      %v261 = vld [vmem:[#allocation4] sm:$0x1]
      %v262 = vsel %vm235, %v261, 0.0
      %263 = vadd.xlane.f32.xlu0 %v262
      %v264 = vpop.xlane.xlu0 %263
      %v265 = vrot.slane %v264, 4
      %v266 = vadd.f32 %v264, %v265
      %v267 = vrot.slane %v266, 2
      %v268 = vadd.f32 %v266, %v267
      %v269 = vrot.slane %v268, 1
      %v270 = vadd.f32 %v268, %v269
      %s271 = vtos %v270
      %s272 = scalar_lea.smem [#allocation13], 2
      %273 = sst [smem:[%s272]] %s271
    $region53: #{tpu_custom_call.1} parent=1 // pred_fallthru
      _
    // Predicated region
    $region54: #{tpu_custom_call.1} parent=1 // pred_check
      _
    $region55: #{tpu_custom_call.1} parent=1 // pred_check_branch
      %275 = sbr.rel (0) target = $region57
    $region56: #{tpu_custom_call.1} parent=1 // pred_region
      %277 = vsyncadd [#allocation7], 0
      %s279 = sshll.u32 %s5, 4
      %s280 = int_to_ptr.hbm [resolvable:$true] %s279
      %282 = dma.smem_to_hbm [#allocation13], 16, %s280, [#allocation7]
    $region57: #{tpu_custom_call.1} parent=1 // pred_fallthru
      _
    // Predicated region
    $region58: #{tpu_custom_call.1} parent=1 // pred_check
      _
    $region59: #{tpu_custom_call.1} parent=1 // pred_check_branch
      %284 = sbr.rel (0) target = $region61
    $region60: #{tpu_custom_call.1} parent=1 // pred_region
      %286 = dma.done [#allocation7], 16
    $region61: #{tpu_custom_call.1} parent=1 // pred_fallthru
      _
    %287 = sfence
    %288 = vsyncpa [#allocation6], 1
    %289 = vsyncpa [#allocation9], 1
    %290 = vsyncpa [#allocation12], 1
    %291 = vsyncpa [#allocation7], 1

</llo_original>
